<compile_context>
chip_gen: v7x
topology: tpu7x:2x2x1
jax: 0.10.0
libtpu: 0.0.40
codegen_flags: <defaults>
</compile_context>

<pallas_src>
import jax
import jax.numpy as jnp
import numpy as np
from jax import lax
from jax.experimental import pallas as pl
from jax.experimental.pallas import tpu as pltpu


HIDDEN = 128
TILE_B = 512  # upper bound; 512 already reaches ~85% of HBM roofline

# lhs (m, k) contracted with rhs (n, k) -> (m, n)   (i.e.  lhs @ rhs.T)
_TRANS_B_DIMS = (((1,), (1,)), ((), ()))


def _round_up(x, m):
    return ((x + m - 1) // m) * m


def _critic_kernel(obs_ref, act_ref, w1o_ref, w1a_ref, b1_ref,
                   w2_ref, b2_ref, w3_ref, b3_ref, o_ref):
    # ---- layer 1: fused concat -> split matmul, f32 accumulation ----
    h1 = (jnp.dot(obs_ref[...], w1o_ref[...], preferred_element_type=jnp.float32)
          + jnp.dot(act_ref[...], w1a_ref[...], preferred_element_type=jnp.float32)
          + b1_ref[...])
    h1 = jnp.maximum(h1, 0.0).astype(jnp.bfloat16)           # (tile_b, 128)

    # ---- layer 2: Linear(128, 128) + ReLU ----
    h2 = jnp.dot(h1, w2_ref[...], preferred_element_type=jnp.float32) + b2_ref[...]
    h2 = jnp.maximum(h2, 0.0).astype(jnp.bfloat16)            # (tile_b, 128)

    # ---- layer 3: Linear(128, 1) as a lane-dense row:  w3_row @ h2^T ----
    q = lax.dot_general(w3_ref[...], h2, _TRANS_B_DIMS,
                        preferred_element_type=jnp.float32)   # (1, tile_b)
    q = q + b3_ref[0, 0]                                      # scalar bias (SMEM)
    o_ref[0] = q                                              # (1, 1, tile_b) block


def critic_forward(obs, act, params, *, tile_b=TILE_B):
    """Pallas implementation of Critic.forward.

    obs: (B, *obs_shape), act: (B, *act_shape) -- float-castable.
    params: w1 (D_in,128), b1 (1,128), w2 (128,128), b2 (1,128),
            w3 (128,1), b3 (1,1) -- float32, weights stored (in, out).
    returns: (B, 1) float32 Q-values.
    """
    obs = jnp.asarray(obs, jnp.float32).reshape(obs.shape[0], -1)
    act = jnp.asarray(act, jnp.float32).reshape(act.shape[0], -1)
    B = obs.shape[0]
    d_obs, d_act = obs.shape[1], act.shape[1]

    # Adaptive batch tile: lane-dense (>=128) output, no huge padding for
    # small batches, capped at TILE_B so VMEM stays bounded for big batches.
    tile_b = int(min(tile_b, max(128, _round_up(B, 128))))
    num_tiles = pl.cdiv(B, tile_b)
    b_pad = num_tiles * tile_b
    if b_pad != B:  # pad batch so every grid step sees a full, defined tile
        obs = jnp.pad(obs, ((0, b_pad - B), (0, 0)))
        act = jnp.pad(act, ((0, b_pad - B), (0, 0)))

    # bf16 operands for the MXU (accumulation stays f32 inside the kernel).
    obs_bf = obs.astype(jnp.bfloat16)
    act_bf = act.astype(jnp.bfloat16)
    w1_obs = params["w1"][:d_obs].astype(jnp.bfloat16)    # (d_obs, 128)
    w1_act = params["w1"][d_obs:].astype(jnp.bfloat16)    # (d_act, 128)
    w2 = params["w2"].astype(jnp.bfloat16)                # (128, 128)
    w3_row = params["w3"].T.astype(jnp.bfloat16)          # (1, 128)
    b1 = params["b1"].astype(jnp.float32)                 # (1, 128)
    b2 = params["b2"].astype(jnp.float32)                 # (1, 128)
    b3 = params["b3"].astype(jnp.float32)                 # (1, 1) -> SMEM

    const2 = lambda i: (0, 0)  # weights/biases: same block every step -> stay resident

    flops = 2 * b_pad * ((d_obs + d_act) * HIDDEN + HIDDEN * HIDDEN + HIDDEN)
    bytes_accessed = (
        obs_bf.size * 2 + act_bf.size * 2 + b_pad * 4            # activations + out
        + (w1_obs.size + w1_act.size + w2.size + w3_row.size) * 2  # bf16 weights
        + (b1.size + b2.size + b3.size) * 4)                       # f32 biases

    out = pl.pallas_call(
        _critic_kernel,
        out_shape=jax.ShapeDtypeStruct((num_tiles, 1, tile_b), jnp.float32),
        grid=(num_tiles,),
        in_specs=[
            pl.BlockSpec((tile_b, d_obs), lambda i: (i, 0)),    # obs tile
            pl.BlockSpec((tile_b, d_act), lambda i: (i, 0)),    # act tile
            pl.BlockSpec((d_obs, HIDDEN), const2),              # w1_obs
            pl.BlockSpec((d_act, HIDDEN), const2),              # w1_act
            pl.BlockSpec((1, HIDDEN), const2),                  # b1
            pl.BlockSpec((HIDDEN, HIDDEN), const2),             # w2
            pl.BlockSpec((1, HIDDEN), const2),                  # b2
            pl.BlockSpec((1, HIDDEN), const2),                  # w3 (row form)
            pl.BlockSpec(memory_space=pltpu.MemorySpace.SMEM),  # b3 scalar
        ],
        out_specs=pl.BlockSpec((1, 1, tile_b), lambda i: (i, 0, 0)),
        compiler_params=pltpu.CompilerParams(
            dimension_semantics=("parallel",)),
        cost_estimate=pl.CostEstimate(
            flops=flops, transcendentals=0, bytes_accessed=bytes_accessed),
    )(obs_bf, act_bf, w1_obs, w1_act, b1, w2, b2, w3_row, b3)

    # lane-dense (num_tiles, 1, tile_b) -> (B, 1)
    return out.reshape(-1)[:B].reshape(B, 1)


def init_critic_params(key, obs_shape, action_shape):
    """Deterministic init mimicking PyTorch's default Linear init
    (uniform in [-1/sqrt(fan_in), 1/sqrt(fan_in)]). Weights stored (in, out)."""
    d_in = int(np.prod(obs_shape)) + int(np.prod(action_shape))
    dims = [(d_in, HIDDEN), (HIDDEN, HIDDEN), (HIDDEN, 1)]
    params = {}
    keys = jax.random.split(key, 2 * len(dims))
    for i, (fi, fo) in enumerate(dims):
        bound = 1.0 / np.sqrt(fi)
        params[f"w{i+1}"] = jax.random.uniform(
            keys[2 * i], (fi, fo), jnp.float32, -bound, bound)
        params[f"b{i+1}"] = jax.random.uniform(
            keys[2 * i + 1], (1, fo), jnp.float32, -bound, bound)
    return params


if __name__ == "__main__":
    key = jax.random.PRNGKey(0)
    k_obs, k_act, k_param = jax.random.split(key, 3)

    # Small synthetic shapes consistent with the module:
    # a flattened-observation env with obs_shape=(4, 6) and action_shape=(8,).
    batch = 2
    obs_shape = (4, 6)        # flattens to 24
    action_shape = (8,)       # flattens to 8  -> D_in = 32

    obs = jax.random.normal(k_obs, (batch, *obs_shape), jnp.float32)
    act = jax.random.normal(k_act, (batch, *action_shape), jnp.float32)
    params = init_critic_params(k_param, obs_shape, action_shape)

    q = critic_forward(obs, act, params)
    jax.block_until_ready(q)
    assert q.shape == (batch, 1)

    # Pure-JAX reference emulating the same bf16-operand / f32-accumulate math.
    x_bf = jnp.concatenate(
        [obs.reshape(batch, -1), act.reshape(batch, -1)], axis=1
    ).astype(jnp.bfloat16)
    w1_bf = params["w1"].astype(jnp.bfloat16)
    w2_bf = params["w2"].astype(jnp.bfloat16)
    w3_bf = params["w3"].astype(jnp.bfloat16)
    h = jnp.maximum(
        jnp.dot(x_bf, w1_bf, preferred_element_type=jnp.float32) + params["b1"], 0.0)
    h = jnp.maximum(
        jnp.dot(h.astype(jnp.bfloat16), w2_bf,
                preferred_element_type=jnp.float32) + params["b2"], 0.0)
    q_ref = jnp.dot(h.astype(jnp.bfloat16), w3_bf,
                    preferred_element_type=jnp.float32) + params["b3"]

    np.testing.assert_allclose(np.asarray(q), np.asarray(q_ref),
                               rtol=1e-2, atol=1e-2)

    print("KERNEL_OK")
</pallas_src>

<mosaic_0001>
module attributes {stable_mosaic.version = 11 : i64} {
  func.func @_critic_kernel(%arg0: i32, %arg1: memref<128x24xbf16, #tpu.memory_space<vmem>>, %arg2: memref<128x8xbf16, #tpu.memory_space<vmem>>, %arg3: memref<24x128xbf16, #tpu.memory_space<vmem>>, %arg4: memref<8x128xbf16, #tpu.memory_space<vmem>>, %arg5: memref<1x128xf32, #tpu.memory_space<vmem>>, %arg6: memref<128x128xbf16, #tpu.memory_space<vmem>>, %arg7: memref<1x128xf32, #tpu.memory_space<vmem>>, %arg8: memref<1x128xbf16, #tpu.memory_space<vmem>>, %arg9: memref<1x1xf32, #tpu.memory_space<smem>>, %arg10: memref<1x1x128xf32, #tpu.memory_space<vmem>>) attributes {dimension_semantics = [#tpu.dimension_semantics<parallel>], iteration_bounds = array<i64: 1>, scalar_prefetch = 0 : i64, scratch_operands = 0 : i64, tpu.core_type = #tpu.core_type<tc>, window_params = [{transform_indices = @transform_0, window_bounds = array<i64: 128, 24>}, {transform_indices = @transform_1, window_bounds = array<i64: 128, 8>}, {pipeline_mode = #tpu.pipeline_mode<synchronous>, transform_indices = @transform_2, window_bounds = array<i64: 24, 128>}, {pipeline_mode = #tpu.pipeline_mode<synchronous>, transform_indices = @transform_3, window_bounds = array<i64: 8, 128>}, {pipeline_mode = #tpu.pipeline_mode<synchronous>, transform_indices = @transform_4, window_bounds = array<i64: 1, 128>}, {pipeline_mode = #tpu.pipeline_mode<synchronous>, transform_indices = @transform_5, window_bounds = array<i64: 128, 128>}, {pipeline_mode = #tpu.pipeline_mode<synchronous>, transform_indices = @transform_6, window_bounds = array<i64: 1, 128>}, {pipeline_mode = #tpu.pipeline_mode<synchronous>, transform_indices = @transform_7, window_bounds = array<i64: 1, 128>}, {transform_indices = @transform_8, window_bounds = array<i64: 1, 1>}, {transform_indices = @transform_9, window_bounds = array<i64: 1, 1, 128>}]} {
    %c0 = arith.constant 0 : index
    %c0_0 = arith.constant 0 : index
    %0 = vector.load %arg1[%c0, %c0_0] : memref<128x24xbf16, #tpu.memory_space<vmem>>, vector<128x24xbf16>
    %c0_1 = arith.constant 0 : index
    %c0_2 = arith.constant 0 : index
    %1 = vector.load %arg3[%c0_1, %c0_2] : memref<24x128xbf16, #tpu.memory_space<vmem>>, vector<24x128xbf16>
    %cst = arith.constant dense<0.000000e+00> : vector<128x128xf32>
    %2 = tpu.matmul %0, %1, %cst {dimension_numbers = #tpu.dot_dimension_numbers<[1], [0], [0], [1], [0, 0, 1, 1], [], []>} : vector<128x24xbf16>, vector<24x128xbf16>, vector<128x128xf32> -> vector<128x128xf32>
    %c0_3 = arith.constant 0 : index
    %c0_4 = arith.constant 0 : index
    %3 = vector.load %arg2[%c0_3, %c0_4] : memref<128x8xbf16, #tpu.memory_space<vmem>>, vector<128x8xbf16>
    %c0_5 = arith.constant 0 : index
    %c0_6 = arith.constant 0 : index
    %4 = vector.load %arg4[%c0_5, %c0_6] : memref<8x128xbf16, #tpu.memory_space<vmem>>, vector<8x128xbf16>
    %cst_7 = arith.constant dense<0.000000e+00> : vector<128x128xf32>
    %5 = tpu.matmul %3, %4, %cst_7 {dimension_numbers = #tpu.dot_dimension_numbers<[1], [0], [0], [1], [0, 0, 1, 1], [], []>} : vector<128x8xbf16>, vector<8x128xbf16>, vector<128x128xf32> -> vector<128x128xf32>
    %6 = arith.addf %2, %5 : vector<128x128xf32>
    %c0_8 = arith.constant 0 : index
    %c0_9 = arith.constant 0 : index
    %7 = vector.load %arg5[%c0_8, %c0_9] : memref<1x128xf32, #tpu.memory_space<vmem>>, vector<1x128xf32>
    %8 = vector.broadcast %7 : vector<1x128xf32> to vector<128x128xf32>
    %9 = arith.addf %6, %8 : vector<128x128xf32>
    %cst_10 = arith.constant 0.000000e+00 : f32
    %10 = vector.broadcast %cst_10 : f32 to vector<128x128xf32>
    %11 = arith.maximumf %9, %10 : vector<128x128xf32>
    %12 = arith.truncf %11 : vector<128x128xf32> to vector<128x128xbf16>
    %c0_11 = arith.constant 0 : index
    %c0_12 = arith.constant 0 : index
    %13 = vector.load %arg6[%c0_11, %c0_12] : memref<128x128xbf16, #tpu.memory_space<vmem>>, vector<128x128xbf16>
    %cst_13 = arith.constant dense<0.000000e+00> : vector<128x128xf32>
    %14 = tpu.matmul %12, %13, %cst_13 {dimension_numbers = #tpu.dot_dimension_numbers<[1], [0], [0], [1], [0, 0, 1, 1], [], []>} : vector<128x128xbf16>, vector<128x128xbf16>, vector<128x128xf32> -> vector<128x128xf32>
    %c0_14 = arith.constant 0 : index
    %c0_15 = arith.constant 0 : index
    %15 = vector.load %arg7[%c0_14, %c0_15] : memref<1x128xf32, #tpu.memory_space<vmem>>, vector<1x128xf32>
    %16 = vector.broadcast %15 : vector<1x128xf32> to vector<128x128xf32>
    %17 = arith.addf %14, %16 : vector<128x128xf32>
    %cst_16 = arith.constant 0.000000e+00 : f32
    %18 = vector.broadcast %cst_16 : f32 to vector<128x128xf32>
    %19 = arith.maximumf %17, %18 : vector<128x128xf32>
    %20 = arith.truncf %19 : vector<128x128xf32> to vector<128x128xbf16>
    %c0_17 = arith.constant 0 : index
    %c0_18 = arith.constant 0 : index
    %21 = vector.load %arg8[%c0_17, %c0_18] : memref<1x128xbf16, #tpu.memory_space<vmem>>, vector<1x128xbf16>
    %cst_19 = arith.constant dense<0.000000e+00> : vector<1x128xf32>
    %22 = tpu.matmul %21, %20, %cst_19 {dimension_numbers = #tpu.dot_dimension_numbers<[1], [1], [0], [0], [0, 0, 1, 0], [], []>} : vector<1x128xbf16>, vector<128x128xbf16>, vector<1x128xf32> -> vector<1x128xf32>
    %c0_20 = arith.constant 0 : index
    %c0_21 = arith.constant 0 : index
    %23 = memref.load %arg9[%c0_20, %c0_21] : memref<1x1xf32, #tpu.memory_space<smem>>
    %24 = vector.broadcast %23 : f32 to vector<1x128xf32>
    %25 = arith.addf %22, %24 : vector<1x128xf32>
    %c0_22 = arith.constant 0 : index
    %c0_23 = arith.constant 0 : index
    %c0_24 = arith.constant 0 : index
    %26 = vector.load %arg10[%c0_22, %c0_23, %c0_24] : memref<1x1x128xf32, #tpu.memory_space<vmem>>, vector<1x1x128xf32>
    %27 = vector.shape_cast %26 : vector<1x1x128xf32> to vector<1x128xf32>
    %28 = vector.shape_cast %25 : vector<1x128xf32> to vector<1x1x128xf32>
    tpu.vector_store %arg10[%c0_22, %c0_23, %c0_24], %28 {strides = array<i32>} : memref<1x1x128xf32, #tpu.memory_space<vmem>>, vector<1x1x128xf32>,
    return
  }
  func.func @transform_0(%arg0: i32) -> (i32, i32) {
    %c0_i32 = arith.constant 0 : i32
    %c0_i32_0 = arith.constant 0 : i32
    return %arg0, %c0_i32 : i32, i32
  }
  func.func @transform_1(%arg0: i32) -> (i32, i32) {
    %c0_i32 = arith.constant 0 : i32
    %c0_i32_0 = arith.constant 0 : i32
    return %arg0, %c0_i32 : i32, i32
  }
  func.func @transform_2(%arg0: i32) -> (i32, i32) {
    %c0_i32 = arith.constant 0 : i32
    %c0_i32_0 = arith.constant 0 : i32
    %c0_i32_1 = arith.constant 0 : i32
    return %c0_i32, %c0_i32_0 : i32, i32
  }
  func.func @transform_3(%arg0: i32) -> (i32, i32) {
    %c0_i32 = arith.constant 0 : i32
    %c0_i32_0 = arith.constant 0 : i32
    %c0_i32_1 = arith.constant 0 : i32
    return %c0_i32, %c0_i32_0 : i32, i32
  }
  func.func @transform_4(%arg0: i32) -> (i32, i32) {
    %c0_i32 = arith.constant 0 : i32
    %c0_i32_0 = arith.constant 0 : i32
    %c0_i32_1 = arith.constant 0 : i32
    return %c0_i32, %c0_i32_0 : i32, i32
  }
  func.func @transform_5(%arg0: i32) -> (i32, i32) {
    %c0_i32 = arith.constant 0 : i32
    %c0_i32_0 = arith.constant 0 : i32
    %c0_i32_1 = arith.constant 0 : i32
    return %c0_i32, %c0_i32_0 : i32, i32
  }
  func.func @transform_6(%arg0: i32) -> (i32, i32) {
    %c0_i32 = arith.constant 0 : i32
    %c0_i32_0 = arith.constant 0 : i32
    %c0_i32_1 = arith.constant 0 : i32
    return %c0_i32, %c0_i32_0 : i32, i32
  }
  func.func @transform_7(%arg0: i32) -> (i32, i32) {
    %c0_i32 = arith.constant 0 : i32
    %c0_i32_0 = arith.constant 0 : i32
    %c0_i32_1 = arith.constant 0 : i32
    return %c0_i32, %c0_i32_0 : i32, i32
  }
  func.func @transform_8(%arg0: i32) -> (i32, i32) {
    %c0_i32 = arith.constant 0 : i32
    %c0_i32_0 = arith.constant 0 : i32
    %c0_i32_1 = arith.constant 0 : i32
    return %c0_i32, %c0_i32_0 : i32, i32
  }
  func.func @transform_9(%arg0: i32) -> (i32, i32, i32) {
    %c0_i32 = arith.constant 0 : i32
    %c0_i32_0 = arith.constant 0 : i32
    %c0_i32_1 = arith.constant 0 : i32
    return %arg0, %c0_i32, %c0_i32_0 : i32, i32, i32
  }
}

</mosaic_0001>

<llo_original>
// kernel: tpu_custom_call.1
$region0: #{tpu_custom_call.1}
  #allocation0 [shape = 'u32[]', space=smem, size = 0x4, offset = 0x4, fixed_abs, tag = 'smem constant byte address 0x4 - core index']
  #allocation1 [shape = 'u32[144,128]{1,0:T(1,128)}', space=vmem, size = 0x12000, scoped, tag = 'internal scratch']
  #allocation2 [shape = 'f32[1,1]{1,0:T(1,128)S(6)}', space=smem, size = 0x200, scoped, tag = 'scoped memory for tpu_custom_call.1']
  %s0 = inlined_call_operand.vmem [shape: bf16[128,24], index: 0, kind: input, shape index: {}]
  %s1 = inlined_call_operand.vmem [shape: bf16[128,8], index: 1, kind: input, shape index: {}]
  %s2 = inlined_call_operand.vmem [shape: bf16[24,128], index: 2, kind: input, shape index: {}]
  %s3 = inlined_call_operand.vmem [shape: bf16[8,128], index: 3, kind: input, shape index: {}]
  %s4 = inlined_call_operand.vmem [shape: f32[1,128], index: 4, kind: input, shape index: {}]
  %s5 = inlined_call_operand.vmem [shape: bf16[128,128], index: 5, kind: input, shape index: {}]
  %s6 = inlined_call_operand.vmem [shape: f32[1,128], index: 6, kind: input, shape index: {}]
  %s7 = inlined_call_operand.vmem [shape: bf16[1,128], index: 7, kind: input, shape index: {}]
  %s8 = inlined_call_operand.<no memory space> [shape: f32[1,1], index: 8, kind: input, shape index: {}]
  %s9 = inlined_call_operand.hbm [shape: f32[1,1,128], index: 9, kind: output, shape index: {}]
  %s10 = sld [smem:[#allocation0]]
  $region46: #{tpu_custom_call.1} parent=0
    _
  %s12 = ssub.s32 1, %s10
  %s13 = scalar_select 0, %s12, %s10
  %14 = sst [smem:[#allocation2]] %s8
  $region1: #{tpu_custom_call.1} parent=0
    #allocation3 [shape = 'u8[512]{0}', space=vmem, size = 0x400, scoped, tag = 'output window, operand 0, single buffered']
    #allocation4 [shape = 's32[1]{0}', space=sflag, size = 0x4, scoped, tag = 'scoped memory for tpu_custom_call.1']
    %15 = vsyncpa [#allocation4], 0
    // Predicated region
    $region2: #{tpu_custom_call.1} parent=1 // pred_check
      _
    $region3: #{tpu_custom_call.1} parent=1 // pred_check_branch
      %17 = sbr.rel (0) target = $region5
    $region4: #{tpu_custom_call.1} parent=1 // pred_region
      _
    $region5: #{tpu_custom_call.1} parent=1 // pred_fallthru
      _
    // Predicated region
    $region6: #{tpu_custom_call.1} parent=1 // pred_check
      _
    $region7: #{tpu_custom_call.1} parent=1 // pred_check_branch
      %19 = sbr.rel (0) target = $region9
    $region8: #{tpu_custom_call.1} parent=1 // pred_region
      _
    $region9: #{tpu_custom_call.1} parent=1 // pred_fallthru
      _
    // Predicated region
    $region10: #{tpu_custom_call.1} parent=1 // pred_check
      _
    $region11: #{tpu_custom_call.1} parent=1 // pred_check_branch
      %21 = sbr.rel (0) target = $region13
    $region12: #{tpu_custom_call.1} parent=1 // pred_region
      _
    $region13: #{tpu_custom_call.1} parent=1 // pred_fallthru
      _
    // Predicated region
    $region14: #{tpu_custom_call.1} parent=1 // pred_check
      _
    $region15: #{tpu_custom_call.1} parent=1 // pred_check_branch
      %23 = sbr.rel (0) target = $region17
    $region16: #{tpu_custom_call.1} parent=1 // pred_region
      _
    $region17: #{tpu_custom_call.1} parent=1 // pred_fallthru
      _
    // Predicated region
    $region18: #{tpu_custom_call.1} parent=1 // pred_check
      _
    $region19: #{tpu_custom_call.1} parent=1 // pred_check_branch
      %25 = sbr.rel (0) target = $region21
    $region20: #{tpu_custom_call.1} parent=1 // pred_region
      _
    $region21: #{tpu_custom_call.1} parent=1 // pred_fallthru
      _
    // Predicated region
    $region22: #{tpu_custom_call.1} parent=1 // pred_check
      _
    $region23: #{tpu_custom_call.1} parent=1 // pred_check_branch
      %27 = sbr.rel (0) target = $region25
    $region24: #{tpu_custom_call.1} parent=1 // pred_region
      _
    $region25: #{tpu_custom_call.1} parent=1 // pred_fallthru
      _
    // Predicated region
    $region26: #{tpu_custom_call.1} parent=1 // pred_check
      _
    $region27: #{tpu_custom_call.1} parent=1 // pred_check_branch
      %29 = sbr.rel (0) target = $region29
    $region28: #{tpu_custom_call.1} parent=1 // pred_region
      _
    $region29: #{tpu_custom_call.1} parent=1 // pred_fallthru
      _
    // Predicated region
    $region30: #{tpu_custom_call.1} parent=1 // pred_check
      _
    $region31: #{tpu_custom_call.1} parent=1 // pred_check_branch
      %31 = sbr.rel (0) target = $region33
    $region32: #{tpu_custom_call.1} parent=1 // pred_region
      _
    $region33: #{tpu_custom_call.1} parent=1 // pred_fallthru
      _
    // Predicated region
    $region34: #{tpu_custom_call.1} parent=1 // pred_check
      _
    $region35: #{tpu_custom_call.1} parent=1 // pred_check_branch
      %33 = sbr.rel (0) target = $region37
    $region36: #{tpu_custom_call.1} parent=1 // pred_region
      _
    $region37: #{tpu_custom_call.1} parent=1 // pred_fallthru
      _
    %v35 = vld [vmem:[%s0] sm:$0xf]
    %v36 = vld [vmem:[%s0 + $0x4] sm:$0xf]
    %v37 = vld [vmem:[%s0 + $0x8] sm:$0xf]
    %v38 = vld [vmem:[%s0 + $0xc] sm:$0xf]
    %v39 = vld [vmem:[%s0 + $0x10] sm:$0xf]
    %v40 = vld [vmem:[%s0 + $0x14] sm:$0xf]
    %v41 = vld [vmem:[%s0 + $0x18] sm:$0xf]
    %v42 = vld [vmem:[%s0 + $0x1c] sm:$0xf]
    %v43 = vld [vmem:[%s0 + $0x20] sm:$0xf]
    %v44 = vld [vmem:[%s0 + $0x24] sm:$0xf]
    %v45 = vld [vmem:[%s0 + $0x28] sm:$0xf]
    %v46 = vld [vmem:[%s0 + $0x2c] sm:$0xf]
    %v47 = vld [vmem:[%s0 + $0x30] sm:$0xf]
    %v48 = vld [vmem:[%s0 + $0x34] sm:$0xf]
    %v49 = vld [vmem:[%s0 + $0x38] sm:$0xf]
    %v50 = vld [vmem:[%s0 + $0x3c] sm:$0xf]
    %v51 = vld [vmem:[%s2] sm:$0xf]
    %v52 = vld [vmem:[%s2 + $0x4] sm:$0xf]
    %v53 = vld [vmem:[%s2 + $0x8] sm:$0xf]
    %v54 = vld [vmem:[%s1] sm:$0xf]
    %v55 = vld [vmem:[%s1 + $0x4] sm:$0xf]
    %v56 = vld [vmem:[%s1 + $0x8] sm:$0xf]
    %v57 = vld [vmem:[%s1 + $0xc] sm:$0xf]
    %v58 = vld [vmem:[%s1 + $0x10] sm:$0xf]
    %v59 = vld [vmem:[%s1 + $0x14] sm:$0xf]
    %v60 = vld [vmem:[%s1 + $0x18] sm:$0xf]
    %v61 = vld [vmem:[%s1 + $0x1c] sm:$0xf]
    %v62 = vld [vmem:[%s1 + $0x20] sm:$0xf]
    %v63 = vld [vmem:[%s1 + $0x24] sm:$0xf]
    %v64 = vld [vmem:[%s1 + $0x28] sm:$0xf]
    %v65 = vld [vmem:[%s1 + $0x2c] sm:$0xf]
    %v66 = vld [vmem:[%s1 + $0x30] sm:$0xf]
    %v67 = vld [vmem:[%s1 + $0x34] sm:$0xf]
    %v68 = vld [vmem:[%s1 + $0x38] sm:$0xf]
    %v69 = vld [vmem:[%s1 + $0x3c] sm:$0xf]
    %v70 = vld [vmem:[%s3] sm:$0xf]
    %v87 = vunpack.c.l.b16 %v54
    %v88 = vunpack.c.l.b16 %v55
    %v89 = vunpack.c.l.b16 %v56
    %v90 = vunpack.c.l.b16 %v57
    %v91 = vunpack.c.l.b16 %v58
    %v92 = vunpack.c.l.b16 %v59
    %v93 = vunpack.c.l.b16 %v60
    %v94 = vunpack.c.l.b16 %v61
    %v95 = vunpack.c.l.b16 %v62
    %v96 = vunpack.c.l.b16 %v63
    %v97 = vunpack.c.l.b16 %v64
    %v98 = vunpack.c.l.b16 %v65
    %v99 = vunpack.c.l.b16 %v66
    %v100 = vunpack.c.l.b16 %v67
    %v101 = vunpack.c.l.b16 %v68
    %v102 = vunpack.c.l.b16 %v69
    %v103 = vpack.c.b16 %v88, %v87
    %v104 = vpack.c.b16 %v90, %v89
    %v105 = vpack.c.b16 %v92, %v91
    %v106 = vpack.c.b16 %v94, %v93
    %v107 = vpack.c.b16 %v96, %v95
    %v108 = vpack.c.b16 %v98, %v97
    %v109 = vpack.c.b16 %v100, %v99
    %v110 = vpack.c.b16 %v102, %v101
    %vm111 = vcmask 64512
    %v113 = vsel %vm111, %v103, 0
    %v116 = vsel %vm111, %v104, 0
    %v119 = vsel %vm111, %v105, 0
    %v122 = vsel %vm111, %v106, 0
    %v125 = vsel %vm111, %v107, 0
    %v128 = vsel %vm111, %v108, 0
    %v131 = vsel %vm111, %v109, 0
    %v134 = vsel %vm111, %v110, 0
    %vm136 = vcmask 1043456
    %v138 = vsel %vm136, %v70, 0
    %140 = vmatprep.subr.bf16.mxu0 0
    %141 = vmatpush1.bf16.msra.mxu0 %v138
    %142 = vmatprep.subr.bf16.mxu0 0
    %143 = vmatpush1.bf16.msra.mxu0 0
    %144 = vmatprep.subr.bf16.mxu0 0
    %145 = vmatpush1.bf16.msra.mxu0 0
    %146 = vmatprep.subr.bf16.mxu0 0
    %147 = vmatpush1.bf16.msra.mxu0 0
    %148 = vmatprep.subr.bf16.mxu0 0
    %149 = vmatpush1.bf16.msra.mxu0 0
    %150 = vmatprep.subr.bf16.mxu0 0
    %151 = vmatpush1.bf16.msra.mxu0 0
    %152 = vmatprep.subr.bf16.mxu0 0
    %153 = vmatpush1.bf16.msra.mxu0 0
    %154 = vmatprep.subr.bf16.mxu0 0
    %155 = vmatpush1.bf16.msra.mxu0 0
    %156 = vmatprep.subr.bf16.mxu0 0
    %157 = vmatpush1.bf16.msra.mxu0 0
    %158 = vmatprep.subr.bf16.mxu0 0
    %159 = vmatpush1.bf16.msra.mxu0 0
    %160 = vmatprep.subr.bf16.mxu0 0
    %161 = vmatpush1.bf16.msra.mxu0 0
    %162 = vmatprep.subr.bf16.mxu0 0
    %163 = vmatpush1.bf16.msra.mxu0 0
    %164 = vmatprep.subr.bf16.mxu0 0
    %165 = vmatpush1.bf16.msra.mxu0 0
    %166 = vmatprep.subr.bf16.mxu0 0
    %167 = vmatpush1.bf16.msra.mxu0 0
    %168 = vmatprep.subr.bf16.mxu0 0
    %169 = vmatpush1.bf16.msra.mxu0 0
    %170 = vmatprep.subr.bf16.mxu0 0
    %171 = vmatpush1.bf16.msra.mxu0 0
    %172 = vmatprep.mubr.bf16.mxu0 0
    %173 = vmatmul.mubr.bf16.gmra.mrb[0].mxu0 %v113
    %v174 = vpop.f32.mrb[0].mxu0
    %v175 = vadd.f32 0.0, %v174
    %v176 = vpop.f32.mrb[0].mxu0
    %v177 = vpop.f32.mrb[0].mxu0
    %v178 = vadd.f32 0.0, %v177
    %v179 = vpop.f32.mrb[0].mxu0
    %180 = vmatprep.mubr.bf16.mxu0 0
    %181 = vmatmul.mubr.bf16.gmra.mrb[0].mxu0 %v116
    %v182 = vpop.f32.mrb[0].mxu0
    %v183 = vadd.f32 0.0, %v182
    %v184 = vpop.f32.mrb[0].mxu0
    %v185 = vpop.f32.mrb[0].mxu0
    %v186 = vadd.f32 0.0, %v185
    %v187 = vpop.f32.mrb[0].mxu0
    %188 = vmatprep.mubr.bf16.mxu0 0
    %189 = vmatmul.mubr.bf16.gmra.mrb[0].mxu0 %v119
    %v190 = vpop.f32.mrb[0].mxu0
    %v191 = vadd.f32 0.0, %v190
    %v192 = vpop.f32.mrb[0].mxu0
    %v193 = vpop.f32.mrb[0].mxu0
    %v194 = vadd.f32 0.0, %v193
    %v195 = vpop.f32.mrb[0].mxu0
    %196 = vmatprep.mubr.bf16.mxu0 0
    %197 = vmatmul.mubr.bf16.gmra.mrb[0].mxu0 %v122
    %v198 = vpop.f32.mrb[0].mxu0
    %v199 = vadd.f32 0.0, %v198
    %v200 = vpop.f32.mrb[0].mxu0
    %v201 = vpop.f32.mrb[0].mxu0
    %v202 = vadd.f32 0.0, %v201
    %v203 = vpop.f32.mrb[0].mxu0
    %204 = vmatprep.mubr.bf16.mxu0 0
    %205 = vmatmul.mubr.bf16.gmra.mrb[0].mxu0 %v125
    %v206 = vpop.f32.mrb[0].mxu0
    %v207 = vadd.f32 0.0, %v206
    %v208 = vpop.f32.mrb[0].mxu0
    %v209 = vpop.f32.mrb[0].mxu0
    %v210 = vadd.f32 0.0, %v209
    %v211 = vpop.f32.mrb[0].mxu0
    %212 = vmatprep.mubr.bf16.mxu0 0
    %213 = vmatmul.mubr.bf16.gmra.mrb[0].mxu0 %v128
    %v214 = vpop.f32.mrb[0].mxu0
    %v215 = vadd.f32 0.0, %v214
    %v216 = vpop.f32.mrb[0].mxu0
    %v217 = vpop.f32.mrb[0].mxu0
    %v218 = vadd.f32 0.0, %v217
    %v219 = vpop.f32.mrb[0].mxu0
    %220 = vmatprep.mubr.bf16.mxu0 0
    %221 = vmatmul.mubr.bf16.gmra.mrb[0].mxu0 %v131
    %v222 = vpop.f32.mrb[0].mxu0
    %v223 = vadd.f32 0.0, %v222
    %v224 = vpop.f32.mrb[0].mxu0
    %v225 = vpop.f32.mrb[0].mxu0
    %v226 = vadd.f32 0.0, %v225
    %v227 = vpop.f32.mrb[0].mxu0
    %228 = vmatprep.mubr.bf16.mxu0 0
    %229 = vmatmul.mubr.bf16.gmra.mrb[0].mxu0 %v134
    %v230 = vpop.f32.mrb[0].mxu0
    %v231 = vadd.f32 0.0, %v230
    %v232 = vpop.f32.mrb[0].mxu0
    %v233 = vpop.f32.mrb[0].mxu0
    %v234 = vadd.f32 0.0, %v233
    %v235 = vpop.f32.mrb[0].mxu0
    %236 = vdwg.mxu0
    %v253 = vunpack.c.l.b16 %v35
    %v254 = vunpack.c.l.b16 %v36
    %v255 = vunpack.c.l.b16 %v37
    %v256 = vunpack.c.l.b16 %v38
    %v257 = vunpack.c.l.b16 %v39
    %v258 = vunpack.c.l.b16 %v40
    %v259 = vunpack.c.l.b16 %v41
    %v260 = vunpack.c.l.b16 %v42
    %v261 = vunpack.c.l.b16 %v43
    %v262 = vunpack.c.l.b16 %v44
    %v263 = vunpack.c.l.b16 %v45
    %v264 = vunpack.c.l.b16 %v46
    %v265 = vunpack.c.l.b16 %v47
    %v266 = vunpack.c.l.b16 %v48
    %v267 = vunpack.c.l.b16 %v49
    %v268 = vunpack.c.l.b16 %v50
    %v269 = vpack.c.b16 %v254, %v253
    %v270 = vpack.c.b16 %v256, %v255
    %v271 = vpack.c.b16 %v258, %v257
    %v272 = vpack.c.b16 %v260, %v259
    %v273 = vpack.c.b16 %v262, %v261
    %v274 = vpack.c.b16 %v264, %v263
    %v275 = vpack.c.b16 %v266, %v265
    %v276 = vpack.c.b16 %v268, %v267
    %v280 = vunpack.c.l.b16 %v51
    %v281 = vunpack.c.l.b16 %v52
    %v282 = vunpack.c.l.b16 %v53
    %v283 = vpack.c.b16 %v281, %v280
    %v284 = vpack.c.b16 %v282, %v282
    %vm286 = vcmask 195584
    %v288 = vsel %vm286, %v269, 0
    %v291 = vsel %vm286, %v270, 0
    %v294 = vsel %vm286, %v271, 0
    %v297 = vsel %vm286, %v272, 0
    %v300 = vsel %vm286, %v273, 0
    %v303 = vsel %vm286, %v274, 0
    %v306 = vsel %vm286, %v275, 0
    %v309 = vsel %vm286, %v276, 0
    %v312 = vsel %vm136, %v284, 0
    %314 = vmatprep.subr.bf16.mxu0 0
    %315 = vmatpush1.bf16.msra.mxu0 %v283
    %316 = vmatprep.subr.bf16.mxu0 0
    %317 = vmatpush1.bf16.msra.mxu0 %v312
    %318 = vmatprep.subr.bf16.mxu0 0
    %319 = vmatpush1.bf16.msra.mxu0 0
    %320 = vmatprep.subr.bf16.mxu0 0
    %321 = vmatpush1.bf16.msra.mxu0 0
    %322 = vmatprep.subr.bf16.mxu0 0
    %323 = vmatpush1.bf16.msra.mxu0 0
    %324 = vmatprep.subr.bf16.mxu0 0
    %325 = vmatpush1.bf16.msra.mxu0 0
    %326 = vmatprep.subr.bf16.mxu0 0
    %327 = vmatpush1.bf16.msra.mxu0 0
    %328 = vmatprep.subr.bf16.mxu0 0
    %329 = vmatpush1.bf16.msra.mxu0 0
    %330 = vmatprep.subr.bf16.mxu0 0
    %331 = vmatpush1.bf16.msra.mxu0 0
    %332 = vmatprep.subr.bf16.mxu0 0
    %333 = vmatpush1.bf16.msra.mxu0 0
    %334 = vmatprep.subr.bf16.mxu0 0
    %335 = vmatpush1.bf16.msra.mxu0 0
    %336 = vmatprep.subr.bf16.mxu0 0
    %337 = vmatpush1.bf16.msra.mxu0 0
    %338 = vmatprep.subr.bf16.mxu0 0
    %339 = vmatpush1.bf16.msra.mxu0 0
    %340 = vmatprep.subr.bf16.mxu0 0
    %341 = vmatpush1.bf16.msra.mxu0 0
    %342 = vmatprep.subr.bf16.mxu0 0
    %343 = vmatpush1.bf16.msra.mxu0 0
    %344 = vmatprep.subr.bf16.mxu0 0
    %345 = vmatpush1.bf16.msra.mxu0 0
    %346 = vmatprep.mubr.bf16.mxu0 0
    %347 = vmatmul.mubr.bf16.gmra.mrb[0].mxu0 %v288
    %v348 = vpop.f32.mrb[0].mxu0
    %v349 = vadd.f32 %v175, %v348
    %v350 = vpop.f32.mrb[0].mxu0
    %v351 = vpop.f32.mrb[0].mxu0
    %v352 = vadd.f32 %v178, %v351
    %v353 = vpop.f32.mrb[0].mxu0
    %354 = vmatprep.mubr.bf16.mxu0 0
    %355 = vmatmul.mubr.bf16.gmra.mrb[0].mxu0 %v291
    %v356 = vpop.f32.mrb[0].mxu0
    %v357 = vadd.f32 %v183, %v356
    %v358 = vpop.f32.mrb[0].mxu0
    %v359 = vpop.f32.mrb[0].mxu0
    %v360 = vadd.f32 %v186, %v359
    %v361 = vpop.f32.mrb[0].mxu0
    %362 = vmatprep.mubr.bf16.mxu0 0
    %363 = vmatmul.mubr.bf16.gmra.mrb[0].mxu0 %v294
    %v364 = vpop.f32.mrb[0].mxu0
    %v365 = vadd.f32 %v191, %v364
    %v366 = vpop.f32.mrb[0].mxu0
    %v367 = vpop.f32.mrb[0].mxu0
    %v368 = vadd.f32 %v194, %v367
    %v369 = vpop.f32.mrb[0].mxu0
    %370 = vmatprep.mubr.bf16.mxu0 0
    %371 = vmatmul.mubr.bf16.gmra.mrb[0].mxu0 %v297
    %v372 = vpop.f32.mrb[0].mxu0
    %v373 = vadd.f32 %v199, %v372
    %v374 = vpop.f32.mrb[0].mxu0
    %v375 = vpop.f32.mrb[0].mxu0
    %v376 = vadd.f32 %v202, %v375
    %v377 = vpop.f32.mrb[0].mxu0
    %378 = vmatprep.mubr.bf16.mxu0 0
    %379 = vmatmul.mubr.bf16.gmra.mrb[0].mxu0 %v300
    %v380 = vpop.f32.mrb[0].mxu0
    %v381 = vadd.f32 %v207, %v380
    %v382 = vpop.f32.mrb[0].mxu0
    %v383 = vpop.f32.mrb[0].mxu0
    %v384 = vadd.f32 %v210, %v383
    %v385 = vpop.f32.mrb[0].mxu0
    %386 = vmatprep.mubr.bf16.mxu0 0
    %387 = vmatmul.mubr.bf16.gmra.mrb[0].mxu0 %v303
    %v388 = vpop.f32.mrb[0].mxu0
    %v389 = vadd.f32 %v215, %v388
    %v390 = vpop.f32.mrb[0].mxu0
    %v391 = vpop.f32.mrb[0].mxu0
    %v392 = vadd.f32 %v218, %v391
    %v393 = vpop.f32.mrb[0].mxu0
    %394 = vmatprep.mubr.bf16.mxu0 0
    %395 = vmatmul.mubr.bf16.gmra.mrb[0].mxu0 %v306
    %v396 = vpop.f32.mrb[0].mxu0
    %v397 = vadd.f32 %v223, %v396
    %v398 = vpop.f32.mrb[0].mxu0
    %v399 = vpop.f32.mrb[0].mxu0
    %v400 = vadd.f32 %v226, %v399
    %v401 = vpop.f32.mrb[0].mxu0
    %402 = vmatprep.mubr.bf16.mxu0 0
    %403 = vmatmul.mubr.bf16.gmra.mrb[0].mxu0 %v309
    %v404 = vpop.f32.mrb[0].mxu0
    %v405 = vadd.f32 %v231, %v404
    %v406 = vpop.f32.mrb[0].mxu0
    %v407 = vpop.f32.mrb[0].mxu0
    %v408 = vadd.f32 %v234, %v407
    %v409 = vpop.f32.mrb[0].mxu0
    %410 = vdwg.mxu0
    %v411 = vld [vmem:[%s4] sm:$0x1]
    %v413 = vlaneseq
    %v414 = vshrl.u32 %v413, 7
    %v415 = vsub.s32 0, %v414
    %v416 = vrot.slane %v411, %v415
    %v418 = vadd.f32 %v349, %v416
    %v419 = vadd.f32 %v352, %v416
    %v420 = vadd.f32 %v357, %v416
    %v421 = vadd.f32 %v360, %v416
    %v422 = vadd.f32 %v365, %v416
    %v423 = vadd.f32 %v368, %v416
    %v424 = vadd.f32 %v373, %v416
    %v425 = vadd.f32 %v376, %v416
    %v426 = vadd.f32 %v381, %v416
    %v427 = vadd.f32 %v384, %v416
    %v428 = vadd.f32 %v389, %v416
    %v429 = vadd.f32 %v392, %v416
    %v430 = vadd.f32 %v397, %v416
    %v431 = vadd.f32 %v400, %v416
    %v432 = vadd.f32 %v405, %v416
    %v433 = vadd.f32 %v408, %v416
    %v434 = vmax.f32 %v418, 0.0
    %v435 = vmax.f32 %v419, 0.0
    %v436 = vmax.f32 %v420, 0.0
    %v437 = vmax.f32 %v421, 0.0
    %v438 = vmax.f32 %v422, 0.0
    %v439 = vmax.f32 %v423, 0.0
    %v440 = vmax.f32 %v424, 0.0
    %v441 = vmax.f32 %v425, 0.0
    %v442 = vmax.f32 %v426, 0.0
    %v443 = vmax.f32 %v427, 0.0
    %v444 = vmax.f32 %v428, 0.0
    %v445 = vmax.f32 %v429, 0.0
    %v446 = vmax.f32 %v430, 0.0
    %v447 = vmax.f32 %v431, 0.0
    %v448 = vmax.f32 %v432, 0.0
    %v449 = vmax.f32 %v433, 0.0
    %v450 = vpack.c.bf16 %v435, %v434
    %v451 = vpack.c.bf16 %v437, %v436
    %v452 = vpack.c.bf16 %v439, %v438
    %v453 = vpack.c.bf16 %v441, %v440
    %v454 = vpack.c.bf16 %v443, %v442
    %v455 = vpack.c.bf16 %v445, %v444
    %v456 = vpack.c.bf16 %v447, %v446
    %v457 = vpack.c.bf16 %v449, %v448
    %v458 = vld [vmem:[%s5] sm:$0xf]
    %v459 = vld [vmem:[%s5 + $0x4] sm:$0xf]
    %v460 = vld [vmem:[%s5 + $0x8] sm:$0xf]
    %v461 = vld [vmem:[%s5 + $0xc] sm:$0xf]
    %v462 = vld [vmem:[%s5 + $0x10] sm:$0xf]
    %v463 = vld [vmem:[%s5 + $0x14] sm:$0xf]
    %v464 = vld [vmem:[%s5 + $0x18] sm:$0xf]
    %v465 = vld [vmem:[%s5 + $0x1c] sm:$0xf]
    %v466 = vld [vmem:[%s5 + $0x20] sm:$0xf]
    %v467 = vld [vmem:[%s5 + $0x24] sm:$0xf]
    %v468 = vld [vmem:[%s5 + $0x28] sm:$0xf]
    %v469 = vld [vmem:[%s5 + $0x2c] sm:$0xf]
    %v470 = vld [vmem:[%s5 + $0x30] sm:$0xf]
    %v471 = vld [vmem:[%s5 + $0x34] sm:$0xf]
    %v472 = vld [vmem:[%s5 + $0x38] sm:$0xf]
    %v473 = vld [vmem:[%s5 + $0x3c] sm:$0xf]
    %v474 = vld [vmem:[%s6] sm:$0x1]
    %v476 = vlaneseq
    %v477 = vshrl.u32 %v476, 7
    %v478 = vsub.s32 0, %v477
    %v479 = vrot.slane %v474, %v478
    %v497 = vunpack.c.l.b16 %v458
    %v498 = vunpack.c.l.b16 %v459
    %v499 = vunpack.c.l.b16 %v460
    %v500 = vunpack.c.l.b16 %v461
    %v501 = vunpack.c.l.b16 %v462
    %v502 = vunpack.c.l.b16 %v463
    %v503 = vunpack.c.l.b16 %v464
    %v504 = vunpack.c.l.b16 %v465
    %v505 = vunpack.c.l.b16 %v466
    %v506 = vunpack.c.l.b16 %v467
    %v507 = vunpack.c.l.b16 %v468
    %v508 = vunpack.c.l.b16 %v469
    %v509 = vunpack.c.l.b16 %v470
    %v510 = vunpack.c.l.b16 %v471
    %v511 = vunpack.c.l.b16 %v472
    %v512 = vunpack.c.l.b16 %v473
    %v513 = vpack.c.b16 %v498, %v497
    %v514 = vpack.c.b16 %v500, %v499
    %v515 = vpack.c.b16 %v502, %v501
    %v516 = vpack.c.b16 %v504, %v503
    %v517 = vpack.c.b16 %v506, %v505
    %v518 = vpack.c.b16 %v508, %v507
    %v519 = vpack.c.b16 %v510, %v509
    %v520 = vpack.c.b16 %v512, %v511
    %529 = vmatprep.subr.bf16.mxu0 0
    %530 = vmatpush1.bf16.msra.mxu0 %v513
    %531 = vmatprep.subr.bf16.mxu0 0
    %532 = vmatpush1.bf16.msra.mxu0 %v514
    %533 = vmatprep.subr.bf16.mxu0 0
    %534 = vmatpush1.bf16.msra.mxu0 %v515
    %535 = vmatprep.subr.bf16.mxu0 0
    %536 = vmatpush1.bf16.msra.mxu0 %v516
    %537 = vmatprep.subr.bf16.mxu0 0
    %538 = vmatpush1.bf16.msra.mxu0 %v517
    %539 = vmatprep.subr.bf16.mxu0 0
    %540 = vmatpush1.bf16.msra.mxu0 %v518
    %541 = vmatprep.subr.bf16.mxu0 0
    %542 = vmatpush1.bf16.msra.mxu0 %v519
    %543 = vmatprep.subr.bf16.mxu0 0
    %544 = vmatpush1.bf16.msra.mxu0 %v520
    %545 = vmatprep.subr.bf16.mxu0 0
    %546 = vmatpush1.bf16.msra.mxu0 0
    %547 = vmatprep.subr.bf16.mxu0 0
    %548 = vmatpush1.bf16.msra.mxu0 0
    %549 = vmatprep.subr.bf16.mxu0 0
    %550 = vmatpush1.bf16.msra.mxu0 0
    %551 = vmatprep.subr.bf16.mxu0 0
    %552 = vmatpush1.bf16.msra.mxu0 0
    %553 = vmatprep.subr.bf16.mxu0 0
    %554 = vmatpush1.bf16.msra.mxu0 0
    %555 = vmatprep.subr.bf16.mxu0 0
    %556 = vmatpush1.bf16.msra.mxu0 0
    %557 = vmatprep.subr.bf16.mxu0 0
    %558 = vmatpush1.bf16.msra.mxu0 0
    %559 = vmatprep.subr.bf16.mxu0 0
    %560 = vmatpush1.bf16.msra.mxu0 0
    %561 = vmatprep.mubr.bf16.mxu0 0
    %562 = vmatmul.mubr.bf16.gmra.mrb[0].mxu0 %v450
    %v563 = vpop.f32.mrb[0].mxu0
    %v564 = vadd.f32 %v479, %v563
    %v565 = vpop.f32.mrb[0].mxu0
    %v566 = vpop.f32.mrb[0].mxu0
    %v567 = vadd.f32 %v479, %v566
    %v568 = vpop.f32.mrb[0].mxu0
    %569 = vmatprep.mubr.bf16.mxu0 0
    %570 = vmatmul.mubr.bf16.gmra.mrb[0].mxu0 %v451
    %v571 = vpop.f32.mrb[0].mxu0
    %v572 = vadd.f32 %v479, %v571
    %v573 = vpop.f32.mrb[0].mxu0
    %v574 = vpop.f32.mrb[0].mxu0
    %v575 = vadd.f32 %v479, %v574
    %v576 = vpop.f32.mrb[0].mxu0
    %577 = vmatprep.mubr.bf16.mxu0 0
    %578 = vmatmul.mubr.bf16.gmra.mrb[0].mxu0 %v452
    %v579 = vpop.f32.mrb[0].mxu0
    %v580 = vadd.f32 %v479, %v579
    %v581 = vpop.f32.mrb[0].mxu0
    %v582 = vpop.f32.mrb[0].mxu0
    %v583 = vadd.f32 %v479, %v582
    %v584 = vpop.f32.mrb[0].mxu0
    %585 = vmatprep.mubr.bf16.mxu0 0
    %586 = vmatmul.mubr.bf16.gmra.mrb[0].mxu0 %v453
    %v587 = vpop.f32.mrb[0].mxu0
    %v588 = vadd.f32 %v479, %v587
    %v589 = vpop.f32.mrb[0].mxu0
    %v590 = vpop.f32.mrb[0].mxu0
    %v591 = vadd.f32 %v479, %v590
    %v592 = vpop.f32.mrb[0].mxu0
    %593 = vmatprep.mubr.bf16.mxu0 0
    %594 = vmatmul.mubr.bf16.gmra.mrb[0].mxu0 %v454
    %v595 = vpop.f32.mrb[0].mxu0
    %v596 = vadd.f32 %v479, %v595
    %v597 = vpop.f32.mrb[0].mxu0
    %v598 = vpop.f32.mrb[0].mxu0
    %v599 = vadd.f32 %v479, %v598
    %v600 = vpop.f32.mrb[0].mxu0
    %601 = vmatprep.mubr.bf16.mxu0 0
    %602 = vmatmul.mubr.bf16.gmra.mrb[0].mxu0 %v455
    %v603 = vpop.f32.mrb[0].mxu0
    %v604 = vadd.f32 %v479, %v603
    %v605 = vpop.f32.mrb[0].mxu0
    %v606 = vpop.f32.mrb[0].mxu0
    %v607 = vadd.f32 %v479, %v606
    %v608 = vpop.f32.mrb[0].mxu0
    %609 = vmatprep.mubr.bf16.mxu0 0
    %610 = vmatmul.mubr.bf16.gmra.mrb[0].mxu0 %v456
    %v611 = vpop.f32.mrb[0].mxu0
    %v612 = vadd.f32 %v479, %v611
    %v613 = vpop.f32.mrb[0].mxu0
    %v614 = vpop.f32.mrb[0].mxu0
    %v615 = vadd.f32 %v479, %v614
    %v616 = vpop.f32.mrb[0].mxu0
    %617 = vmatprep.mubr.bf16.mxu0 0
    %618 = vmatmul.mubr.bf16.gmra.mrb[0].mxu0 %v457
    %v619 = vpop.f32.mrb[0].mxu0
    %v620 = vadd.f32 %v479, %v619
    %v621 = vpop.f32.mrb[0].mxu0
    %v622 = vpop.f32.mrb[0].mxu0
    %v623 = vadd.f32 %v479, %v622
    %v624 = vpop.f32.mrb[0].mxu0
    %625 = vdwg.mxu0
    %v626 = vmax.f32 %v564, 0.0
    %v627 = vmax.f32 %v567, 0.0
    %v628 = vmax.f32 %v572, 0.0
    %v629 = vmax.f32 %v575, 0.0
    %v630 = vmax.f32 %v580, 0.0
    %v631 = vmax.f32 %v583, 0.0
    %v632 = vmax.f32 %v588, 0.0
    %v633 = vmax.f32 %v591, 0.0
    %v634 = vmax.f32 %v596, 0.0
    %v635 = vmax.f32 %v599, 0.0
    %v636 = vmax.f32 %v604, 0.0
    %v637 = vmax.f32 %v607, 0.0
    %v638 = vmax.f32 %v612, 0.0
    %v639 = vmax.f32 %v615, 0.0
    %v640 = vmax.f32 %v620, 0.0
    %v641 = vmax.f32 %v623, 0.0
    %v642 = vpack.c.bf16 %v627, %v626
    %v643 = vpack.c.bf16 %v629, %v628
    %v644 = vpack.c.bf16 %v631, %v630
    %v645 = vpack.c.bf16 %v633, %v632
    %v646 = vpack.c.bf16 %v635, %v634
    %v647 = vpack.c.bf16 %v637, %v636
    %v648 = vpack.c.bf16 %v639, %v638
    %v649 = vpack.c.bf16 %v641, %v640
    %v650 = vld [vmem:[%s7] sm:$0x1]
    %s651 = sld [smem:[#allocation2]]
    %v652 = vstv %s651
    %653 = vmatprep.subr.bf16.mxu0 0
    %654 = vmatpush1.bf16.xpose.msra.mxu0 %v642
    %655 = vmatprep.subr.bf16.mxu0 0
    %656 = vmatpush1.bf16.xpose.msra.mxu0 %v643
    %657 = vmatprep.subr.bf16.mxu0 0
    %658 = vmatpush1.bf16.xpose.msra.mxu0 %v644
    %659 = vmatprep.subr.bf16.mxu0 0
    %660 = vmatpush1.bf16.xpose.msra.mxu0 %v645
    %661 = vmatprep.subr.bf16.mxu0 0
    %662 = vmatpush1.bf16.xpose.msra.mxu0 %v646
    %663 = vmatprep.subr.bf16.mxu0 0
    %664 = vmatpush1.bf16.xpose.msra.mxu0 %v647
    %665 = vmatprep.subr.bf16.mxu0 0
    %666 = vmatpush1.bf16.xpose.msra.mxu0 %v648
    %667 = vmatprep.subr.bf16.mxu0 0
    %668 = vmatpush1.bf16.xpose.msra.mxu0 %v649
    %669 = vmatprep.subr.bf16.mxu0 0
    %670 = vmatpush1.bf16.xpose.msra.mxu0 0
    %671 = vmatprep.subr.bf16.mxu0 0
    %672 = vmatpush1.bf16.xpose.msra.mxu0 0
    %673 = vmatprep.subr.bf16.mxu0 0
    %674 = vmatpush1.bf16.xpose.msra.mxu0 0
    %675 = vmatprep.subr.bf16.mxu0 0
    %676 = vmatpush1.bf16.xpose.msra.mxu0 0
    %677 = vmatprep.subr.bf16.mxu0 0
    %678 = vmatpush1.bf16.xpose.msra.mxu0 0
    %679 = vmatprep.subr.bf16.mxu0 0
    %680 = vmatpush1.bf16.xpose.msra.mxu0 0
    %681 = vmatprep.subr.bf16.mxu0 0
    %682 = vmatpush1.bf16.xpose.msra.mxu0 0
    %683 = vmatprep.subr.bf16.mxu0 0
    %684 = vmatpush1.bf16.xpose.msra.mxu0 0
    %685 = vmatprep.mubr.bf16.mxu0 0
    %686 = vmatmul.mubr.bf16.gmra.mrb[0].mxu0 %v650
    %v687 = vpop.f32.mrb[0].mxu0
    %v688 = vadd.f32 %v652, %v687
    %v689 = vpop.f32.mrb[0].mxu0
    %v690 = vpop.f32.mrb[0].mxu0
    %v691 = vpop.f32.mrb[0].mxu0
    %692 = vdwg.mxu0
    %693 = vst [vmem:[#allocation3] sm:$0x1] %v688
    // Predicated region
    $region38: #{tpu_custom_call.1} parent=1 // pred_check
      _
    $region39: #{tpu_custom_call.1} parent=1 // pred_check_branch
      %695 = sbr.rel (0) target = $region41
    $region40: #{tpu_custom_call.1} parent=1 // pred_region
      %s697 = ssub.s32 16, 16
      %698 = vsyncadd [#allocation4], %s697
      %s700 = sshll.u32 [#allocation3], 4
      %s701 = int_to_ptr.vmem [resolvable:$true] %s700
      %703 = dma.vmem_to_hbm [thread:$0]  %s701, 16, %s9, [#allocation4]
    $region41: #{tpu_custom_call.1} parent=1 // pred_fallthru
      _
    // Predicated region
    $region42: #{tpu_custom_call.1} parent=1 // pred_check
      _
    $region43: #{tpu_custom_call.1} parent=1 // pred_check_branch
      %705 = sbr.rel (0) target = $region45
    $region44: #{tpu_custom_call.1} parent=1 // pred_region
      %706 = dma.done [#allocation4], 16
    $region45: #{tpu_custom_call.1} parent=1 // pred_fallthru
      _
    %707 = vsyncpa [#allocation4], 1

</llo_original>
